<compile_context>
chip_gen: v6e
topology: v6e:2x2x1
jax: 0.10.0
libtpu: 0.0.40
codegen_flags: <defaults>
</compile_context>

<pallas_src>
import functools
import math

import jax
import jax.numpy as jnp
import jax.scipy.linalg as jsl
from jax.experimental import pallas as pl
from jax.experimental.pallas import tpu as pltpu

_SUB = 8  # sublane granularity


def _round_up(x, m):
    return ((x + m - 1) // m) * m


def _cdiv(a, b):
    return -(-a // b)


def _zeros_index_map(ndim):
    def imap(*_):
        return (0,) * ndim
    return imap


def _stacked_imlp_kernel(x_ref, *refs, layer_kinds, group_size, out_dim,
                         n_groups, softmax, normalize):
    """Forward of all (MXU-width fused) IMLP groups for one batch-row block.

    refs layout: for each layer, its weight tensor(s) ("first"/"plain": one,
    "skip": two) followed by its f32 bias tensor; the output ref is last.
    All param tensors have a leading n_groups axis and are resident in VMEM.
    """
    o_ref = refs[-1]
    p_refs = refs[:-1]
    cd = p_refs[0].dtype                      # matmul input dtype (f32 or bf16)
    x_in = x_ref[...]                         # (NB, enc_dim), already in cd
    g_out = group_size * out_dim

    for gi in range(n_groups):                # static unroll over model groups
        idx = 0
        h = None
        for kind in layer_kinds:              # static unroll over layers
            if kind == "first":
                w = p_refs[idx][gi]
                idx += 1
                acc = jnp.dot(x_in, w, preferred_element_type=jnp.float32)
            else:
                hm = jnp.maximum(h, 0.0)      # ReLU in f32 (VPU)
                if hm.dtype != cd:
                    hm = hm.astype(cd)
                if kind == "skip":
                    wh = p_refs[idx][gi]      # block-diagonal (g*hid, g*out)
                    wx = p_refs[idx + 1][gi]  # output-concat  (enc,   g*out)
                    idx += 2
                    acc = (jnp.dot(hm, wh, preferred_element_type=jnp.float32)
                           + jnp.dot(x_in, wx, preferred_element_type=jnp.float32))
                else:
                    w = p_refs[idx][gi]       # block-diagonal (g*in, g*out)
                    idx += 1
                    acc = jnp.dot(hm, w, preferred_element_type=jnp.float32)
            b = p_refs[idx][gi]               # (1, g*out_i), f32
            idx += 1
            h = acc + b                       # f32 activations

        if softmax:
            # per-model softmax over its own out_dim chunk
            for mi in range(group_size):
                z = h[:, mi * out_dim:(mi + 1) * out_dim]
                zmax = jnp.max(z, axis=-1, keepdims=True)
                e = jnp.exp(z - zmax)                    # EUP
                s = jnp.sum(e, axis=-1, keepdims=True)
                r = pl.reciprocal(s, approx=True)        # EUP slot (free-ish)
                r = r * (2.0 - s * r)                    # one Newton refinement
                z = e * r
                if normalize:
                    z = (z + 1.0) * 0.5
                lo = gi * g_out + mi * out_dim
                o_ref[:, lo:lo + out_dim] = z.astype(o_ref.dtype)
        else:
            h = jnp.tanh(h)
            if normalize:
                h = (h + 1.0) * 0.5
            # lane-contiguous slab store for the whole group
            o_ref[:, gi * g_out:(gi + 1) * g_out] = h.astype(o_ref.dtype)


def stacked_imlp_forward(x, weights, biases, *, b_vals, skip_layers,
                         use_positional, softmax=False, normalize=False,
                         param_dtype=jnp.float32, block_rows=2048,
                         mxu_width=256):
    """weights[i]: (n_models, in_i, out_i); biases[i]: (n_models, 1, out_i).

    Returns (n_models, N, out_dim) float32, matching torch.stack(outputs).
    mxu_width: 256 for v6e/v7x, 128 for v5e (sizes the model-fusion group).
    """
    n_models = int(weights[0].shape[0])
    num_layers = len(weights)
    N = int(x.shape[0])
    out_dim = int(weights[-1].shape[-1])
    skip_layers = tuple(int(s) for s in skip_layers)

    x = x.astype(jnp.float32)
    # ---- positional encoding hoisted out of the kernel (model-independent) ----
    if use_positional:
        b = jnp.asarray(b_vals, jnp.float32)
        proj = jnp.einsum("ij,k->ijk", x, b)                       # (N, D, P)
        mapped = jnp.concatenate([jnp.sin(proj), jnp.cos(proj)], axis=1)
        x_enc = jnp.transpose(mapped, (0, 2, 1)).reshape(N, -1)    # (N, 2*D*P)
    else:
        x_enc = x
    enc_dim = int(x_enc.shape[1])
    # bf16 x_enc halves the dominant HBM read in perf mode (f32: no-op)
    x_enc = x_enc.astype(param_dtype)

    in_dims = tuple(int(w.shape[1]) for w in weights)
    out_dims = tuple(int(w.shape[2]) for w in weights)

    # ---- model-fusion grouping sized to the MXU width ----
    max_hidden = max(out_dims)
    group_size = max(1, min(n_models, mxu_width // max(1, max_hidden)))
    n_groups = _cdiv(n_models, group_size)
    n_models_pad = n_groups * group_size

    def _pad_models(arr):
        if n_models_pad == n_models:
            return arr
        pad = [(0, n_models_pad - n_models)] + [(0, 0)] * (arr.ndim - 1)
        return jnp.pad(arr, pad)

    # ---- pack per-layer params: output-concat / block-diagonal per group ----
    layer_kinds = []
    params = []
    for i in range(num_layers):
        w = _pad_models(jnp.asarray(weights[i], jnp.float32))
        bvec = _pad_models(jnp.asarray(biases[i], jnp.float32).reshape(n_models, -1))
        gw1, gw2, gb = [], [], []
        for gi in range(n_groups):
            ms = range(gi * group_size, (gi + 1) * group_size)
            if i == 0:
                gw1.append(jnp.concatenate([w[m] for m in ms], axis=1))
                kind = "first"
            elif i in skip_layers:
                hid_prev = in_dims[i] - enc_dim
                gw1.append(jsl.block_diag(*[w[m][:hid_prev] for m in ms]))
                gw2.append(jnp.concatenate([w[m][hid_prev:] for m in ms], axis=1))
                kind = "skip"
            else:
                gw1.append(jsl.block_diag(*[w[m] for m in ms]))
                kind = "plain"
            gb.append(jnp.concatenate([bvec[m] for m in ms], axis=0).reshape(1, -1))
        layer_kinds.append(kind)
        params.append(jnp.stack(gw1).astype(param_dtype))
        if kind == "skip":
            params.append(jnp.stack(gw2).astype(param_dtype))
        params.append(jnp.stack(gb))                       # bias stays f32

    # ---- batch-row blocking: minimise padding, keep >=2 steps for v7x ----
    min_steps = 2 if N >= 2 * _SUB else 1
    steps = max(_cdiv(N, block_rows), min_steps)
    nb = _round_up(_cdiv(N, steps), _SUB)
    n_pad = _round_up(N, nb)
    if n_pad != N:
        x_enc = jnp.pad(x_enc, ((0, n_pad - N), (0, 0)))
    grid = (n_pad // nb,)
    out_width = n_models_pad * out_dim

    # ---- cost estimate (lets XLA schedule around the kernel) ----
    flops_per_row = 0
    for i in range(num_layers):
        if layer_kinds[i] == "first":
            flops_per_row += 2 * enc_dim * group_size * out_dims[i]
        elif layer_kinds[i] == "skip":
            hid_prev = in_dims[i] - enc_dim
            flops_per_row += 2 * (group_size * hid_prev) * (group_size * out_dims[i])
            flops_per_row += 2 * enc_dim * (group_size * out_dims[i])
        else:
            flops_per_row += 2 * (group_size * in_dims[i]) * (group_size * out_dims[i])
    flops = flops_per_row * n_groups * n_pad
    transcendentals = n_pad * n_models_pad * out_dim
    param_bytes = sum(int(p.size) * p.dtype.itemsize for p in params)
    x_itemsize = jnp.dtype(param_dtype).itemsize
    bytes_accessed = (n_pad * enc_dim * x_itemsize + param_bytes
                      + n_pad * out_width * 4)

    # ---- VMEM budget: only raise the scoped limit if we'd exceed it ----
    max_fused_width = max([group_size * d for d in out_dims] + [enc_dim])
    vmem_est = (2 * nb * enc_dim * x_itemsize       # double-buffered x tile
                + param_bytes                        # resident params
                + 2 * nb * out_width * 4             # double-buffered out tile
                + 4 * nb * max_fused_width * 4)      # live f32 temporaries
    vmem_limit = None
    if vmem_est > 24 * (1 << 20):
        try:
            phys = int(pltpu.get_tpu_info().vmem_capacity_bytes)
        except Exception:
            phys = 64 * (1 << 20)                    # v7x per-TC VMEM (smallest)
        vmem_limit = int(min(2 * vmem_est, (phys * 7) // 8))

    kernel = functools.partial(
        _stacked_imlp_kernel,
        layer_kinds=tuple(layer_kinds),
        group_size=group_size,
        out_dim=out_dim,
        n_groups=n_groups,
        softmax=softmax,
        normalize=normalize,
    )

    in_specs = [pl.BlockSpec((nb, enc_dim), lambda n: (n, 0))]
    for p in params:
        # full stacked params per layer, resident in VMEM across the batch grid
        in_specs.append(pl.BlockSpec(p.shape, _zeros_index_map(p.ndim)))

    out = pl.pallas_call(
        kernel,
        out_shape=jax.ShapeDtypeStruct((n_pad, out_width), jnp.float32),
        grid=grid,
        in_specs=in_specs,
        out_specs=pl.BlockSpec((nb, out_width), lambda n: (n, 0)),
        compiler_params=pltpu.CompilerParams(
            dimension_semantics=("parallel",),
            vmem_limit_bytes=vmem_limit),
        cost_estimate=pl.CostEstimate(
            flops=int(flops),
            transcendentals=int(transcendentals),
            bytes_accessed=int(bytes_accessed)),
    )(x_enc, *params)

    # (N_pad, M_pad*out) -> (M, N, out), matching torch.stack(outputs)
    out = out.reshape(n_pad, n_models_pad, out_dim).transpose(1, 0, 2)
    return out[:n_models, :N]


# ---------------- pure-JAX reference (mirrors the PyTorch forward) -----------
def _imlp_ref(x, ws, bs, b_vals, skip_layers, use_positional, softmax, normalize):
    if use_positional:
        proj = jnp.einsum("ij,k->ijk", x, jnp.asarray(b_vals, jnp.float32))
        mapped = jnp.concatenate([jnp.sin(proj), jnp.cos(proj)], axis=1)
        x = jnp.transpose(mapped, (0, 2, 1)).reshape(x.shape[0], -1)
    inp = x
    for i, (w, b) in enumerate(zip(ws, bs)):
        if i > 0:
            x = jax.nn.relu(x)
        if i in skip_layers:
            x = jnp.concatenate([x, inp], axis=1)
        x = x @ w + b
    x = jax.nn.softmax(x, axis=1) if softmax else jnp.tanh(x)
    if normalize:
        x = (x + 1.0) * 0.5
    return x


if __name__ == "__main__":
    # StackedIMLP(n_models=3, input_dim=2, output_dim=3, hidden_dim=32,
    #             num_layers=4, use_positional=True, positional_dim=4,
    #             skip_layers=(2,))
    n_models = 3
    N = 30
    input_dim = 2
    output_dim = 3
    hidden_dim = 32
    num_layers = 4
    positional_dim = 4
    use_positional = True
    skip_layers = (2,)

    b_vals = [2.0 ** i * math.pi for i in range(positional_dim)]
    enc_dim = 2 * input_dim * positional_dim if use_positional else input_dim

    # per-layer dims (same rule as IMLP.__init__)
    in_dims_, out_dims_ = [], []
    for i in range(num_layers):
        if i == 0:
            d_in = enc_dim
        elif i in skip_layers:
            d_in = hidden_dim + enc_dim
        else:
            d_in = hidden_dim
        d_out = output_dim if i == num_layers - 1 else hidden_dim
        in_dims_.append(d_in)
        out_dims_.append(d_out)

    key = jax.random.PRNGKey(0)
    keys = jax.random.split(key, 2 * n_models * num_layers + 1)
    x = jax.random.normal(keys[-1], (N, input_dim), dtype=jnp.float32)

    # deterministic parameter init (nn.Linear-style uniform(-1/sqrt(in), 1/sqrt(in)))
    weights, biases = [], []
    ki = 0
    for i in range(num_layers):
        bound = 1.0 / math.sqrt(in_dims_[i])
        w_m, b_m = [], []
        for _ in range(n_models):
            w_m.append(jax.random.uniform(keys[ki], (in_dims_[i], out_dims_[i]),
                                          minval=-bound, maxval=bound,
                                          dtype=jnp.float32)); ki += 1
            b_m.append(jax.random.uniform(keys[ki], (1, out_dims_[i]),
                                          minval=-bound, maxval=bound,
                                          dtype=jnp.float32)); ki += 1
        weights.append(jnp.stack(w_m))   # (n_models, in_i, out_i)
        biases.append(jnp.stack(b_m))    # (n_models, 1, out_i)

    # references
    ref = jnp.stack([
        _imlp_ref(x, [w[m] for w in weights], [b[m, 0] for b in biases],
                  b_vals, skip_layers, use_positional, False, False)
        for m in range(n_models)
    ])
    ref_sm = jnp.stack([
        _imlp_ref(x, [w[m] for w in weights], [b[m, 0] for b in biases],
                  b_vals, skip_layers, use_positional, True, True)
        for m in range(n_models)
    ])

    # 1) f32, default MXU width (all models in one fused group) — strict check
    out_f32 = jax.block_until_ready(stacked_imlp_forward(
        x, weights, biases, b_vals=b_vals, skip_layers=skip_layers,
        use_positional=use_positional, softmax=False, normalize=False,
        param_dtype=jnp.float32))
    assert out_f32.shape == (n_models, N, output_dim), out_f32.shape
    assert jnp.allclose(out_f32, ref, atol=1e-5, rtol=1e-5), \
        float(jnp.max(jnp.abs(out_f32 - ref)))

    # 2) f32, small mxu_width -> two model groups + zero-padded model — strict
    out_grp = jax.block_until_ready(stacked_imlp_forward(
        x, weights, biases, b_vals=b_vals, skip_layers=skip_layers,
        use_positional=use_positional, softmax=False, normalize=False,
        param_dtype=jnp.float32, mxu_width=64))
    assert out_grp.shape == (n_models, N, output_dim), out_grp.shape
    assert jnp.allclose(out_grp, ref, atol=1e-5, rtol=1e-5), \
        float(jnp.max(jnp.abs(out_grp - ref)))

    # 3) bf16 matmul inputs (v6e/v7x perf mode), f32 accumulation — loose check
    out_bf16 = jax.block_until_ready(stacked_imlp_forward(
        x, weights, biases, b_vals=b_vals, skip_layers=skip_layers,
        use_positional=use_positional, softmax=False, normalize=False,
        param_dtype=jnp.bfloat16))
    assert jnp.allclose(out_bf16, ref, atol=5e-2, rtol=5e-2), \
        float(jnp.max(jnp.abs(out_bf16 - ref)))

    # 4) softmax + normalize head branch (approx reciprocal + Newton step)
    out_sm = jax.block_until_ready(stacked_imlp_forward(
        x, weights, biases, b_vals=b_vals, skip_layers=skip_layers,
        use_positional=use_positional, softmax=True, normalize=True,
        param_dtype=jnp.float32))
    assert jnp.allclose(out_sm, ref_sm, atol=1e-4, rtol=1e-4), \
        float(jnp.max(jnp.abs(out_sm - ref_sm)))

    print("KERNEL_OK")
</pallas_src>

<mosaic_0001>
module attributes {stable_mosaic.version = 11 : i64} {
  func.func @_stacked_imlp_kernel(%arg0: i32, %arg1: memref<16x16xf32, #tpu.memory_space<vmem>>, %arg2: memref<1x16x96xf32, #tpu.memory_space<vmem>>, %arg3: memref<1x1x96xf32, #tpu.memory_space<vmem>>, %arg4: memref<1x96x96xf32, #tpu.memory_space<vmem>>, %arg5: memref<1x1x96xf32, #tpu.memory_space<vmem>>, %arg6: memref<1x96x96xf32, #tpu.memory_space<vmem>>, %arg7: memref<1x16x96xf32, #tpu.memory_space<vmem>>, %arg8: memref<1x1x96xf32, #tpu.memory_space<vmem>>, %arg9: memref<1x96x9xf32, #tpu.memory_space<vmem>>, %arg10: memref<1x1x9xf32, #tpu.memory_space<vmem>>, %arg11: memref<16x9xf32, #tpu.memory_space<vmem>>) attributes {dimension_semantics = [#tpu.dimension_semantics<parallel>], iteration_bounds = array<i64: 2>, scalar_prefetch = 0 : i64, scratch_operands = 0 : i64, tpu.core_type = #tpu.core_type<tc>, window_params = [{transform_indices = @transform_0, window_bounds = array<i64: 16, 16>}, {pipeline_mode = #tpu.pipeline_mode<synchronous>, transform_indices = @transform_1, window_bounds = array<i64: 1, 16, 96>}, {pipeline_mode = #tpu.pipeline_mode<synchronous>, transform_indices = @transform_2, window_bounds = array<i64: 1, 1, 96>}, {pipeline_mode = #tpu.pipeline_mode<synchronous>, transform_indices = @transform_3, window_bounds = array<i64: 1, 96, 96>}, {pipeline_mode = #tpu.pipeline_mode<synchronous>, transform_indices = @transform_4, window_bounds = array<i64: 1, 1, 96>}, {pipeline_mode = #tpu.pipeline_mode<synchronous>, transform_indices = @transform_5, window_bounds = array<i64: 1, 96, 96>}, {pipeline_mode = #tpu.pipeline_mode<synchronous>, transform_indices = @transform_6, window_bounds = array<i64: 1, 16, 96>}, {pipeline_mode = #tpu.pipeline_mode<synchronous>, transform_indices = @transform_7, window_bounds = array<i64: 1, 1, 96>}, {pipeline_mode = #tpu.pipeline_mode<synchronous>, transform_indices = @transform_8, window_bounds = array<i64: 1, 96, 9>}, {pipeline_mode = #tpu.pipeline_mode<synchronous>, transform_indices = @transform_9, window_bounds = array<i64: 1, 1, 9>}, {transform_indices = @transform_10, window_bounds = array<i64: 16, 9>}]} {
    %c0 = arith.constant 0 : index
    %c0_0 = arith.constant 0 : index
    %0 = vector.load %arg1[%c0, %c0_0] : memref<16x16xf32, #tpu.memory_space<vmem>>, vector<16x16xf32>
    %c0_1 = arith.constant 0 : index
    %c0_2 = arith.constant 0 : index
    %c0_3 = arith.constant 0 : index
    %1 = vector.load %arg2[%c0_1, %c0_2, %c0_3] : memref<1x16x96xf32, #tpu.memory_space<vmem>>, vector<1x16x96xf32>
    %2 = vector.shape_cast %1 : vector<1x16x96xf32> to vector<16x96xf32>
    %cst = arith.constant dense<0.000000e+00> : vector<16x96xf32>
    %3 = tpu.matmul %0, %2, %cst {dimension_numbers = #tpu.dot_dimension_numbers<[1], [0], [0], [1], [0, 0, 1, 1], [], []>} : vector<16x16xf32>, vector<16x96xf32>, vector<16x96xf32> -> vector<16x96xf32>
    %c0_4 = arith.constant 0 : index
    %c0_5 = arith.constant 0 : index
    %c0_6 = arith.constant 0 : index
    %4 = vector.load %arg3[%c0_4, %c0_5, %c0_6] : memref<1x1x96xf32, #tpu.memory_space<vmem>>, vector<1x1x96xf32>
    %5 = vector.shape_cast %4 : vector<1x1x96xf32> to vector<1x96xf32>
    %6 = vector.broadcast %5 : vector<1x96xf32> to vector<16x96xf32>
    %7 = arith.addf %3, %6 : vector<16x96xf32>
    %cst_7 = arith.constant 0.000000e+00 : f32
    %8 = vector.broadcast %cst_7 : f32 to vector<16x96xf32>
    %9 = arith.maximumf %7, %8 : vector<16x96xf32>
    %c0_8 = arith.constant 0 : index
    %c0_9 = arith.constant 0 : index
    %c0_10 = arith.constant 0 : index
    %10 = vector.load %arg4[%c0_8, %c0_9, %c0_10] : memref<1x96x96xf32, #tpu.memory_space<vmem>>, vector<1x96x96xf32>
    %11 = vector.shape_cast %10 : vector<1x96x96xf32> to vector<96x96xf32>
    %cst_11 = arith.constant dense<0.000000e+00> : vector<16x96xf32>
    %12 = tpu.matmul %9, %11, %cst_11 {dimension_numbers = #tpu.dot_dimension_numbers<[1], [0], [0], [1], [0, 0, 1, 1], [], []>} : vector<16x96xf32>, vector<96x96xf32>, vector<16x96xf32> -> vector<16x96xf32>
    %c0_12 = arith.constant 0 : index
    %c0_13 = arith.constant 0 : index
    %c0_14 = arith.constant 0 : index
    %13 = vector.load %arg5[%c0_12, %c0_13, %c0_14] : memref<1x1x96xf32, #tpu.memory_space<vmem>>, vector<1x1x96xf32>
    %14 = vector.shape_cast %13 : vector<1x1x96xf32> to vector<1x96xf32>
    %15 = vector.broadcast %14 : vector<1x96xf32> to vector<16x96xf32>
    %16 = arith.addf %12, %15 : vector<16x96xf32>
    %cst_15 = arith.constant 0.000000e+00 : f32
    %17 = vector.broadcast %cst_15 : f32 to vector<16x96xf32>
    %18 = arith.maximumf %16, %17 : vector<16x96xf32>
    %c0_16 = arith.constant 0 : index
    %c0_17 = arith.constant 0 : index
    %c0_18 = arith.constant 0 : index
    %19 = vector.load %arg6[%c0_16, %c0_17, %c0_18] : memref<1x96x96xf32, #tpu.memory_space<vmem>>, vector<1x96x96xf32>
    %20 = vector.shape_cast %19 : vector<1x96x96xf32> to vector<96x96xf32>
    %c0_19 = arith.constant 0 : index
    %c0_20 = arith.constant 0 : index
    %c0_21 = arith.constant 0 : index
    %21 = vector.load %arg7[%c0_19, %c0_20, %c0_21] : memref<1x16x96xf32, #tpu.memory_space<vmem>>, vector<1x16x96xf32>
    %22 = vector.shape_cast %21 : vector<1x16x96xf32> to vector<16x96xf32>
    %cst_22 = arith.constant dense<0.000000e+00> : vector<16x96xf32>
    %23 = tpu.matmul %18, %20, %cst_22 {dimension_numbers = #tpu.dot_dimension_numbers<[1], [0], [0], [1], [0, 0, 1, 1], [], []>} : vector<16x96xf32>, vector<96x96xf32>, vector<16x96xf32> -> vector<16x96xf32>
    %cst_23 = arith.constant dense<0.000000e+00> : vector<16x96xf32>
    %24 = tpu.matmul %0, %22, %cst_23 {dimension_numbers = #tpu.dot_dimension_numbers<[1], [0], [0], [1], [0, 0, 1, 1], [], []>} : vector<16x16xf32>, vector<16x96xf32>, vector<16x96xf32> -> vector<16x96xf32>
    %25 = arith.addf %23, %24 : vector<16x96xf32>
    %c0_24 = arith.constant 0 : index
    %c0_25 = arith.constant 0 : index
    %c0_26 = arith.constant 0 : index
    %26 = vector.load %arg8[%c0_24, %c0_25, %c0_26] : memref<1x1x96xf32, #tpu.memory_space<vmem>>, vector<1x1x96xf32>
    %27 = vector.shape_cast %26 : vector<1x1x96xf32> to vector<1x96xf32>
    %28 = vector.broadcast %27 : vector<1x96xf32> to vector<16x96xf32>
    %29 = arith.addf %25, %28 : vector<16x96xf32>
    %cst_27 = arith.constant 0.000000e+00 : f32
    %30 = vector.broadcast %cst_27 : f32 to vector<16x96xf32>
    %31 = arith.maximumf %29, %30 : vector<16x96xf32>
    %c0_28 = arith.constant 0 : index
    %c0_29 = arith.constant 0 : index
    %c0_30 = arith.constant 0 : index
    %32 = vector.load %arg9[%c0_28, %c0_29, %c0_30] : memref<1x96x9xf32, #tpu.memory_space<vmem>>, vector<1x96x9xf32>
    %33 = vector.shape_cast %32 : vector<1x96x9xf32> to vector<96x9xf32>
    %cst_31 = arith.constant dense<0.000000e+00> : vector<16x9xf32>
    %34 = tpu.matmul %31, %33, %cst_31 {dimension_numbers = #tpu.dot_dimension_numbers<[1], [0], [0], [1], [0, 0, 1, 1], [], []>} : vector<16x96xf32>, vector<96x9xf32>, vector<16x9xf32> -> vector<16x9xf32>
    %c0_32 = arith.constant 0 : index
    %c0_33 = arith.constant 0 : index
    %c0_34 = arith.constant 0 : index
    %35 = vector.load %arg10[%c0_32, %c0_33, %c0_34] : memref<1x1x9xf32, #tpu.memory_space<vmem>>, vector<1x1x9xf32>
    %36 = vector.shape_cast %35 : vector<1x1x9xf32> to vector<1x9xf32>
    %37 = vector.broadcast %36 : vector<1x9xf32> to vector<16x9xf32>
    %38 = arith.addf %34, %37 : vector<16x9xf32>
    %39 = math.tanh %38 : vector<16x9xf32>
    %c0_35 = arith.constant 0 : index
    %c0_36 = arith.constant 0 : index
    %40 = vector.load %arg11[%c0_35, %c0_36] : memref<16x9xf32, #tpu.memory_space<vmem>>, vector<16x9xf32>
    tpu.vector_store %arg11[%c0_35, %c0_36], %39 {strides = array<i32>} : memref<16x9xf32, #tpu.memory_space<vmem>>, vector<16x9xf32>,
    return
  }
  func.func @transform_0(%arg0: i32) -> (i32, i32) {
    %c0_i32 = arith.constant 0 : i32
    %c0_i32_0 = arith.constant 0 : i32
    return %arg0, %c0_i32 : i32, i32
  }
  func.func @transform_1(%arg0: i32) -> (i32, i32, i32) {
    %c0_i32 = arith.constant 0 : i32
    %c0_i32_0 = arith.constant 0 : i32
    %c0_i32_1 = arith.constant 0 : i32
    %c0_i32_2 = arith.constant 0 : i32
    return %c0_i32, %c0_i32_0, %c0_i32_1 : i32, i32, i32
  }
  func.func @transform_2(%arg0: i32) -> (i32, i32, i32) {
    %c0_i32 = arith.constant 0 : i32
    %c0_i32_0 = arith.constant 0 : i32
    %c0_i32_1 = arith.constant 0 : i32
    %c0_i32_2 = arith.constant 0 : i32
    return %c0_i32, %c0_i32_0, %c0_i32_1 : i32, i32, i32
  }
  func.func @transform_3(%arg0: i32) -> (i32, i32, i32) {
    %c0_i32 = arith.constant 0 : i32
    %c0_i32_0 = arith.constant 0 : i32
    %c0_i32_1 = arith.constant 0 : i32
    %c0_i32_2 = arith.constant 0 : i32
    return %c0_i32, %c0_i32_0, %c0_i32_1 : i32, i32, i32
  }
  func.func @transform_4(%arg0: i32) -> (i32, i32, i32) {
    %c0_i32 = arith.constant 0 : i32
    %c0_i32_0 = arith.constant 0 : i32
    %c0_i32_1 = arith.constant 0 : i32
    %c0_i32_2 = arith.constant 0 : i32
    return %c0_i32, %c0_i32_0, %c0_i32_1 : i32, i32, i32
  }
  func.func @transform_5(%arg0: i32) -> (i32, i32, i32) {
    %c0_i32 = arith.constant 0 : i32
    %c0_i32_0 = arith.constant 0 : i32
    %c0_i32_1 = arith.constant 0 : i32
    %c0_i32_2 = arith.constant 0 : i32
    return %c0_i32, %c0_i32_0, %c0_i32_1 : i32, i32, i32
  }
  func.func @transform_6(%arg0: i32) -> (i32, i32, i32) {
    %c0_i32 = arith.constant 0 : i32
    %c0_i32_0 = arith.constant 0 : i32
    %c0_i32_1 = arith.constant 0 : i32
    %c0_i32_2 = arith.constant 0 : i32
    return %c0_i32, %c0_i32_0, %c0_i32_1 : i32, i32, i32
  }
  func.func @transform_7(%arg0: i32) -> (i32, i32, i32) {
    %c0_i32 = arith.constant 0 : i32
    %c0_i32_0 = arith.constant 0 : i32
    %c0_i32_1 = arith.constant 0 : i32
    %c0_i32_2 = arith.constant 0 : i32
    return %c0_i32, %c0_i32_0, %c0_i32_1 : i32, i32, i32
  }
  func.func @transform_8(%arg0: i32) -> (i32, i32, i32) {
    %c0_i32 = arith.constant 0 : i32
    %c0_i32_0 = arith.constant 0 : i32
    %c0_i32_1 = arith.constant 0 : i32
    %c0_i32_2 = arith.constant 0 : i32
    return %c0_i32, %c0_i32_0, %c0_i32_1 : i32, i32, i32
  }
  func.func @transform_9(%arg0: i32) -> (i32, i32, i32) {
    %c0_i32 = arith.constant 0 : i32
    %c0_i32_0 = arith.constant 0 : i32
    %c0_i32_1 = arith.constant 0 : i32
    %c0_i32_2 = arith.constant 0 : i32
    return %c0_i32, %c0_i32_0, %c0_i32_1 : i32, i32, i32
  }
  func.func @transform_10(%arg0: i32) -> (i32, i32) {
    %c0_i32 = arith.constant 0 : i32
    %c0_i32_0 = arith.constant 0 : i32
    return %arg0, %c0_i32 : i32, i32
  }
}

</mosaic_0001>

<llo_original>
// kernel: tpu_custom_call.1
$region0: #{tpu_custom_call.1}
  #allocation0 [shape = 'u32[]', space=smem, size = 0x4, offset = 0x4, fixed_abs, tag = 'smem constant byte address 0x4 - core index']
  #allocation1 [shape = 'u32[144,128]{1,0:T(1,128)}', space=vmem, size = 0x12000, scoped, tag = 'internal scratch']
  %s0 = inlined_call_operand.vmem [shape: f32[32,16], index: 0, kind: input, shape index: {}]
  %s1 = inlined_call_operand.vmem [shape: f32[1,16,96], index: 1, kind: input, shape index: {}]
  %s2 = inlined_call_operand.vmem [shape: f32[1,1,96], index: 2, kind: input, shape index: {}]
  %s3 = inlined_call_operand.vmem [shape: f32[1,96,96], index: 3, kind: input, shape index: {}]
  %s4 = inlined_call_operand.vmem [shape: f32[1,1,96], index: 4, kind: input, shape index: {}]
  %s5 = inlined_call_operand.hbm [shape: f32[1,96,96], index: 5, kind: input, shape index: {}]
  %s6 = inlined_call_operand.vmem [shape: f32[1,16,96], index: 6, kind: input, shape index: {}]
  %s7 = inlined_call_operand.vmem [shape: f32[1,1,96], index: 7, kind: input, shape index: {}]
  %s8 = inlined_call_operand.vmem [shape: f32[1,96,9], index: 8, kind: input, shape index: {}]
  %s9 = inlined_call_operand.vmem [shape: f32[1,1,9], index: 9, kind: input, shape index: {}]
  %s10 = inlined_call_operand.vmem [shape: f32[32,9], index: 10, kind: output, shape index: {}]
  %s11 = sld [smem:[#allocation0]]
  $region77: #{tpu_custom_call.1} parent=0
    _
  %s13 = ssub.s32 1, %s11
  %s14 = scalar_select 0, %s13, %s11
  $region1: #{tpu_custom_call.1} parent=0
    #allocation2 [shape = 'u8[49152]{0}', space=vmem, size = 0xc000, scoped, tag = 'input window, operand 5, single buffered']
    #allocation3 [shape = 's32[2]{0}', space=sflag, size = 0x8, scoped, tag = 'scoped memory for tpu_custom_call.1']
    %15 = vsyncpa [#allocation3], 0
    loop: start=0, step=1, limit=4
    $region2: #{tpu_custom_call.1} parent=1 // loop_pre_header
      _
    $region3: #{tpu_custom_call.1} parent=1 // loop_header
      %s17 = sphi 0, %s21
      %p18 = scmp.ge.s32.totalorder %s17, 4
      %s27 = sphi 0, %s29
      %s30 = sphi 0, %s27
      %s31 = sphi 0, %s30
      %s47 = sphi 0, %s31
      %s51 = sphi 0, %s51
      %s53 = sphi 0, %s51
      %s54 = sphi 0, %s53
      %s68 = sphi 0, %s54
      %s72 = sphi 0, %s72
      %s74 = sphi 0, %s72
      %s75 = sphi 0, %s74
      %s89 = sphi 0, %s75
      %s93 = sphi 0, %s93
      %s95 = sphi 0, %s93
      %s96 = sphi 0, %s95
      %s110 = sphi 0, %s96
      %s114 = sphi 0, %s114
      %s116 = sphi 0, %s114
      %s117 = sphi 0, %s116
      %s131 = sphi 0, %s117
      %s135 = sphi 0, %s135
      %s137 = sphi 0, %s135
      %s138 = sphi 0, %s137
      %s152 = sphi 0, %s138
      %s156 = sphi 0, %s156
      %s158 = sphi 0, %s156
      %s159 = sphi 0, %s158
      %s173 = sphi 0, %s159
      %s177 = sphi 0, %s177
      %s179 = sphi 0, %s177
      %s180 = sphi 0, %s179
      %s194 = sphi 0, %s180
      %s198 = sphi 0, %s198
      %s200 = sphi 0, %s198
      %s201 = sphi 0, %s200
      %s215 = sphi 0, %s201
      %s219 = sphi 0, %s219
      %s221 = sphi 0, %s219
      %s222 = sphi 0, %s221
      %s236 = sphi 0, %s222
      %s242 = sphi 0, %s244
      %s245 = sphi 0, %s242
      %s246 = sphi 0, %s245
      %s262 = sphi 0, %s246
    $region4: #{tpu_custom_call.1} parent=1 // loop_header_branch
      %20 = sbr.rel (%p18) target = $region8
    $region5: #{tpu_custom_call.1} parent=1 // loop_body
      %s22 = ssub.s32 %s17, 1
      %s23 = ssub.s32 %s17, 2
      %s24 = sadd.s32 %s17, 1
      %s25 = ssub.s32 %s17, %s24
      %p26 = scmp.eq.s32.totalorder %s25, 0
      %s28 = sadd.s32 %s27, 1
      %s29 = scalar_select %p26, %s27, %s28
      %p32 = pneg %p26
      %p33 = scmp.eq.s32.totalorder %s17, 1
      %p34 = por %p32, %p33
      %p35 = scmp.ne.s32.totalorder %s27, %s30
      %p36 = scmp.eq.s32.totalorder %s17, 0
      %p37 = por %p35, %p36
      %p38 = scmp.ne.s32.totalorder %s27, %s30
      %p39 = scmp.eq.s32.totalorder %s22, 1
      %p40 = por %p38, %p39
      %p41 = scmp.ne.s32.totalorder %s30, %s31
      %p42 = scmp.eq.s32.totalorder %s22, 0
      %p43 = por %p41, %p42
      %p44 = scmp.ne.s32.totalorder %s30, %s31
      %p45 = scmp.eq.s32.totalorder %s23, 1
      %p46 = por %p44, %p45
      %p48 = scmp.ne.s32.totalorder %s31, %s47
      %p49 = scmp.eq.s32.totalorder %s23, 0
      %p50 = por %p48, %p49
      %s52 = sadd.s32 %s51, 1
      %p55 = scmp.eq.s32.totalorder %s17, 1
      %p56 = scmp.ne.s32.totalorder %s51, %s53
      %p57 = scmp.eq.s32.totalorder %s17, 0
      %p58 = por %p56, %p57
      %p59 = scmp.ne.s32.totalorder %s51, %s53
      %p60 = scmp.eq.s32.totalorder %s22, 1
      %p61 = por %p59, %p60
      %p62 = scmp.ne.s32.totalorder %s53, %s54
      %p63 = scmp.eq.s32.totalorder %s22, 0
      %p64 = por %p62, %p63
      %p65 = scmp.ne.s32.totalorder %s53, %s54
      %p66 = scmp.eq.s32.totalorder %s23, 1
      %p67 = por %p65, %p66
      %p69 = scmp.ne.s32.totalorder %s54, %s68
      %p70 = scmp.eq.s32.totalorder %s23, 0
      %p71 = por %p69, %p70
      %s73 = sadd.s32 %s72, 1
      %p76 = scmp.eq.s32.totalorder %s17, 1
      %p77 = scmp.ne.s32.totalorder %s72, %s74
      %p78 = scmp.eq.s32.totalorder %s17, 0
      %p79 = por %p77, %p78
      %p80 = scmp.ne.s32.totalorder %s72, %s74
      %p81 = scmp.eq.s32.totalorder %s22, 1
      %p82 = por %p80, %p81
      %p83 = scmp.ne.s32.totalorder %s74, %s75
      %p84 = scmp.eq.s32.totalorder %s22, 0
      %p85 = por %p83, %p84
      %p86 = scmp.ne.s32.totalorder %s74, %s75
      %p87 = scmp.eq.s32.totalorder %s23, 1
      %p88 = por %p86, %p87
      %p90 = scmp.ne.s32.totalorder %s75, %s89
      %p91 = scmp.eq.s32.totalorder %s23, 0
      %p92 = por %p90, %p91
      %s94 = sadd.s32 %s93, 1
      %p97 = scmp.eq.s32.totalorder %s17, 1
      %p98 = scmp.ne.s32.totalorder %s93, %s95
      %p99 = scmp.eq.s32.totalorder %s17, 0
      %p100 = por %p98, %p99
      %p101 = scmp.ne.s32.totalorder %s93, %s95
      %p102 = scmp.eq.s32.totalorder %s22, 1
      %p103 = por %p101, %p102
      %p104 = scmp.ne.s32.totalorder %s95, %s96
      %p105 = scmp.eq.s32.totalorder %s22, 0
      %p106 = por %p104, %p105
      %p107 = scmp.ne.s32.totalorder %s95, %s96
      %p108 = scmp.eq.s32.totalorder %s23, 1
      %p109 = por %p107, %p108
      %p111 = scmp.ne.s32.totalorder %s96, %s110
      %p112 = scmp.eq.s32.totalorder %s23, 0
      %p113 = por %p111, %p112
      %s115 = sadd.s32 %s114, 1
      %p118 = scmp.eq.s32.totalorder %s17, 1
      %p119 = scmp.ne.s32.totalorder %s114, %s116
      %p120 = scmp.eq.s32.totalorder %s17, 0
      %p121 = por %p119, %p120
      %p122 = scmp.ne.s32.totalorder %s114, %s116
      %p123 = scmp.eq.s32.totalorder %s22, 1
      %p124 = por %p122, %p123
      %p125 = scmp.ne.s32.totalorder %s116, %s117
      %p126 = scmp.eq.s32.totalorder %s22, 0
      %p127 = por %p125, %p126
      %p128 = scmp.ne.s32.totalorder %s116, %s117
      %p129 = scmp.eq.s32.totalorder %s23, 1
      %p130 = por %p128, %p129
      %p132 = scmp.ne.s32.totalorder %s117, %s131
      %p133 = scmp.eq.s32.totalorder %s23, 0
      %p134 = por %p132, %p133
      %s136 = sadd.s32 %s135, 1
      %p139 = scmp.eq.s32.totalorder %s17, 1
      %p140 = scmp.ne.s32.totalorder %s135, %s137
      %p141 = scmp.eq.s32.totalorder %s17, 0
      %p142 = por %p140, %p141
      %p143 = scmp.ne.s32.totalorder %s135, %s137
      %p144 = scmp.eq.s32.totalorder %s22, 1
      %p145 = por %p143, %p144
      %p146 = scmp.ne.s32.totalorder %s137, %s138
      %p147 = scmp.eq.s32.totalorder %s22, 0
      %p148 = por %p146, %p147
      %p149 = scmp.ne.s32.totalorder %s137, %s138
      %p150 = scmp.eq.s32.totalorder %s23, 1
      %p151 = por %p149, %p150
      %p153 = scmp.ne.s32.totalorder %s138, %s152
      %p154 = scmp.eq.s32.totalorder %s23, 0
      %p155 = por %p153, %p154
      %s157 = sadd.s32 %s156, 1
      %p160 = scmp.eq.s32.totalorder %s17, 1
      %p161 = scmp.ne.s32.totalorder %s156, %s158
      %p162 = scmp.eq.s32.totalorder %s17, 0
      %p163 = por %p161, %p162
      %p164 = scmp.ne.s32.totalorder %s156, %s158
      %p165 = scmp.eq.s32.totalorder %s22, 1
      %p166 = por %p164, %p165
      %p167 = scmp.ne.s32.totalorder %s158, %s159
      %p168 = scmp.eq.s32.totalorder %s22, 0
      %p169 = por %p167, %p168
      %p170 = scmp.ne.s32.totalorder %s158, %s159
      %p171 = scmp.eq.s32.totalorder %s23, 1
      %p172 = por %p170, %p171
      %p174 = scmp.ne.s32.totalorder %s159, %s173
      %p175 = scmp.eq.s32.totalorder %s23, 0
      %p176 = por %p174, %p175
      %s178 = sadd.s32 %s177, 1
      %p181 = scmp.eq.s32.totalorder %s17, 1
      %p182 = scmp.ne.s32.totalorder %s177, %s179
      %p183 = scmp.eq.s32.totalorder %s17, 0
      %p184 = por %p182, %p183
      %p185 = scmp.ne.s32.totalorder %s177, %s179
      %p186 = scmp.eq.s32.totalorder %s22, 1
      %p187 = por %p185, %p186
      %p188 = scmp.ne.s32.totalorder %s179, %s180
      %p189 = scmp.eq.s32.totalorder %s22, 0
      %p190 = por %p188, %p189
      %p191 = scmp.ne.s32.totalorder %s179, %s180
      %p192 = scmp.eq.s32.totalorder %s23, 1
      %p193 = por %p191, %p192
      %p195 = scmp.ne.s32.totalorder %s180, %s194
      %p196 = scmp.eq.s32.totalorder %s23, 0
      %p197 = por %p195, %p196
      %s199 = sadd.s32 %s198, 1
      %p202 = scmp.eq.s32.totalorder %s17, 1
      %p203 = scmp.ne.s32.totalorder %s198, %s200
      %p204 = scmp.eq.s32.totalorder %s17, 0
      %p205 = por %p203, %p204
      %p206 = scmp.ne.s32.totalorder %s198, %s200
      %p207 = scmp.eq.s32.totalorder %s22, 1
      %p208 = por %p206, %p207
      %p209 = scmp.ne.s32.totalorder %s200, %s201
      %p210 = scmp.eq.s32.totalorder %s22, 0
      %p211 = por %p209, %p210
      %p212 = scmp.ne.s32.totalorder %s200, %s201
      %p213 = scmp.eq.s32.totalorder %s23, 1
      %p214 = por %p212, %p213
      %p216 = scmp.ne.s32.totalorder %s201, %s215
      %p217 = scmp.eq.s32.totalorder %s23, 0
      %p218 = por %p216, %p217
      %s220 = sadd.s32 %s219, 1
      %p223 = scmp.eq.s32.totalorder %s17, 1
      %p224 = scmp.ne.s32.totalorder %s219, %s221
      %p225 = scmp.eq.s32.totalorder %s17, 0
      %p226 = por %p224, %p225
      %p227 = scmp.ne.s32.totalorder %s219, %s221
      %p228 = scmp.eq.s32.totalorder %s22, 1
      %p229 = por %p227, %p228
      %p230 = scmp.ne.s32.totalorder %s221, %s222
      %p231 = scmp.eq.s32.totalorder %s22, 0
      %p232 = por %p230, %p231
      %p233 = scmp.ne.s32.totalorder %s221, %s222
      %p234 = scmp.eq.s32.totalorder %s23, 1
      %p235 = por %p233, %p234
      %p237 = scmp.ne.s32.totalorder %s222, %s236
      %p238 = scmp.eq.s32.totalorder %s23, 0
      %p239 = por %p237, %p238
      %s240 = ssub.s32 %s17, %s24
      %p241 = scmp.eq.s32.totalorder %s240, 0
      %s243 = sadd.s32 %s242, 1
      %s244 = scalar_select %p241, %s242, %s243
      %p247 = pneg %p241
      %p248 = scmp.eq.s32.totalorder %s17, 1
      %p249 = por %p247, %p248
      %p250 = scmp.ne.s32.totalorder %s242, %s245
      %p251 = scmp.eq.s32.totalorder %s17, 0
      %p252 = por %p250, %p251
      %p253 = scmp.ne.s32.totalorder %s242, %s245
      %p254 = scmp.eq.s32.totalorder %s22, 1
      %p255 = por %p253, %p254
      %p256 = scmp.ne.s32.totalorder %s245, %s246
      %p257 = scmp.eq.s32.totalorder %s22, 0
      %p258 = por %p256, %p257
      %p259 = scmp.ne.s32.totalorder %s245, %s246
      %p260 = scmp.eq.s32.totalorder %s23, 1
      %p261 = por %p259, %p260
      %p263 = scmp.ne.s32.totalorder %s246, %s262
      %p264 = scmp.eq.s32.totalorder %s23, 0
      %p265 = por %p263, %p264
      %p266 = scmp.le.s32.totalorder 1, %s17
      %p267 = scmp.lt.s32.totalorder %s17, 3
      %p268 = pnand %p266, %p267
      %p269 = pneg %p268
      // Predicated region
      $region9: #{tpu_custom_call.1} parent=5 // pred_check
        _
      $region10: #{tpu_custom_call.1} parent=5 // pred_check_branch
        %271 = sbr.rel (%p268) target = $region12
      $region11: #{tpu_custom_call.1} parent=5 // pred_region
        %s272 = ssub.s32 %s17, 1
        // Predicated region
        $region13: #{tpu_custom_call.1} parent=11 // pred_check
          %p273 = pneg %p64
        $region14: #{tpu_custom_call.1} parent=11 // pred_check_branch
          %275 = sbr.rel (%p273) target = $region16
        $region15: #{tpu_custom_call.1} parent=11 // pred_region
          _
        $region16: #{tpu_custom_call.1} parent=11 // pred_fallthru
          _
        // Predicated region
        $region17: #{tpu_custom_call.1} parent=11 // pred_check
          %p276 = pneg %p85
        $region18: #{tpu_custom_call.1} parent=11 // pred_check_branch
          %278 = sbr.rel (%p276) target = $region20
        $region19: #{tpu_custom_call.1} parent=11 // pred_region
          _
        $region20: #{tpu_custom_call.1} parent=11 // pred_fallthru
          _
        // Predicated region
        $region21: #{tpu_custom_call.1} parent=11 // pred_check
          %p279 = pneg %p106
        $region22: #{tpu_custom_call.1} parent=11 // pred_check_branch
          %281 = sbr.rel (%p279) target = $region24
        $region23: #{tpu_custom_call.1} parent=11 // pred_region
          _
        $region24: #{tpu_custom_call.1} parent=11 // pred_fallthru
          _
        // Predicated region
        $region25: #{tpu_custom_call.1} parent=11 // pred_check
          %p282 = pneg %p127
        $region26: #{tpu_custom_call.1} parent=11 // pred_check_branch
          %284 = sbr.rel (%p282) target = $region28
        $region27: #{tpu_custom_call.1} parent=11 // pred_region
          _
        $region28: #{tpu_custom_call.1} parent=11 // pred_fallthru
          _
        // Predicated region
        $region29: #{tpu_custom_call.1} parent=11 // pred_check
          %p285 = pneg %p148
        $region30: #{tpu_custom_call.1} parent=11 // pred_check_branch
          %287 = sbr.rel (%p285) target = $region32
        $region31: #{tpu_custom_call.1} parent=11 // pred_region
          %s289 = ssub.s32 1536, 1536
          %290 = vsyncadd [#allocation3], %s289
          %s291 = sshll.u32 [#allocation2], 4
          %s292 = int_to_ptr.vmem [resolvable:$true] %s291
          %297 = dma.hbm_to_vmem [thread:$0]  %s5, 1536, %s292, [#allocation3], 128, 128, 8
        $region32: #{tpu_custom_call.1} parent=11 // pred_fallthru
          _
        // Predicated region
        $region33: #{tpu_custom_call.1} parent=11 // pred_check
          %p298 = pneg %p169
        $region34: #{tpu_custom_call.1} parent=11 // pred_check_branch
          %300 = sbr.rel (%p298) target = $region36
        $region35: #{tpu_custom_call.1} parent=11 // pred_region
          _
        $region36: #{tpu_custom_call.1} parent=11 // pred_fallthru
          _
        // Predicated region
        $region37: #{tpu_custom_call.1} parent=11 // pred_check
          %p301 = pneg %p190
        $region38: #{tpu_custom_call.1} parent=11 // pred_check_branch
          %303 = sbr.rel (%p301) target = $region40
        $region39: #{tpu_custom_call.1} parent=11 // pred_region
          _
        $region40: #{tpu_custom_call.1} parent=11 // pred_fallthru
          _
        // Predicated region
        $region41: #{tpu_custom_call.1} parent=11 // pred_check
          %p304 = pneg %p211
        $region42: #{tpu_custom_call.1} parent=11 // pred_check_branch
          %306 = sbr.rel (%p304) target = $region44
        $region43: #{tpu_custom_call.1} parent=11 // pred_region
          _
        $region44: #{tpu_custom_call.1} parent=11 // pred_fallthru
          _
        // Predicated region
        $region45: #{tpu_custom_call.1} parent=11 // pred_check
          %p307 = pneg %p232
        $region46: #{tpu_custom_call.1} parent=11 // pred_check_branch
          %309 = sbr.rel (%p307) target = $region48
        $region47: #{tpu_custom_call.1} parent=11 // pred_region
          _
        $region48: #{tpu_custom_call.1} parent=11 // pred_fallthru
          _
      $region12: #{tpu_custom_call.1} parent=5 // pred_fallthru
        _
      %p310 = scmp.lt.s32.totalorder %s17, 2
      // Predicated region
      $region49: #{tpu_custom_call.1} parent=5 // pred_check
        %p311 = pneg %p310
      $region50: #{tpu_custom_call.1} parent=5 // pred_check_branch
        %313 = sbr.rel (%p311) target = $region52
      $region51: #{tpu_custom_call.1} parent=5 // pred_region
        // Predicated region
        $region53: #{tpu_custom_call.1} parent=51 // pred_check
          %p314 = pneg %p37
        $region54: #{tpu_custom_call.1} parent=51 // pred_check_branch
          %316 = sbr.rel (%p314) target = $region56
        $region55: #{tpu_custom_call.1} parent=51 // pred_region
          %s317 = smul.u32 2, %s17
          %p318 = scmp.lt.s32.totalorder %s317, 3
          %s319 = scalar_select %p318, %s317, 3
          %s320 = smul.addr %s319, 8
          %s321 = scalar_lea.vmem %s0, %s320
          %s322 = smul.u32 2, %s17
        $region56: #{tpu_custom_call.1} parent=51 // pred_fallthru
          _
      $region52: #{tpu_custom_call.1} parent=5 // pred_fallthru
        _
      %p323 = scmp.le.s32.totalorder 1, %s17
      %p324 = scmp.lt.s32.totalorder %s17, 3
      %p325 = pnand %p323, %p324
      %p326 = pneg %p325
      // Predicated region
      $region57: #{tpu_custom_call.1} parent=5 // pred_check
        _
      $region58: #{tpu_custom_call.1} parent=5 // pred_check_branch
        %328 = sbr.rel (%p325) target = $region60
      $region59: #{tpu_custom_call.1} parent=5 // pred_region
        %s329 = ssub.s32 %s17, 1
        // Predicated region
        $region61: #{tpu_custom_call.1} parent=59 // pred_check
          %p330 = pneg %p148
        $region62: #{tpu_custom_call.1} parent=59 // pred_check_branch
          %332 = sbr.rel (%p330) target = $region64
        $region63: #{tpu_custom_call.1} parent=59 // pred_region
          %333 = dma.done [#allocation3], 1536
        $region64: #{tpu_custom_call.1} parent=59 // pred_fallthru
          _
        %s334 = smul.u32 2, %s22
        %p335 = scmp.lt.s32.totalorder %s334, 3
        %s336 = scalar_select %p335, %s334, 3
        %s337 = smul.addr %s336, 8
        %s338 = scalar_lea.vmem %s0, %s337
        %p339 = pneg %p43
        %p340 = pneg %p40
        %p341 = pneg %p64
        %p342 = pneg %p61
        %p343 = pneg %p85
        %p344 = pneg %p82
        %p345 = pneg %p106
        %p346 = pneg %p103
        %p347 = pneg %p127
        %p348 = pneg %p124
        %p349 = pneg %p148
        %p350 = pneg %p145
        %p351 = pneg %p169
        %p352 = pneg %p166
        %p353 = pneg %p190
        %p354 = pneg %p187
        %p355 = pneg %p211
        %p356 = pneg %p208
        %p357 = pneg %p232
        %p358 = pneg %p229
        %p359 = pneg %p258
        %p360 = pneg %p255
        %s361 = smul.u32 2, %s22
        %p362 = scmp.lt.s32.totalorder %s361, 3
        %s363 = scalar_select %p362, %s361, 3
        %s364 = smul.addr %s363, 8
        %s365 = scalar_lea.vmem %s10, %s364
        %s366 = smul.u32 2, %s22
        %p367 = scmp.lt.s32.totalorder %s366, 3
        %s368 = scalar_select %p367, %s366, 3
        %s369 = smul.addr %s368, 8
        %s370 = scalar_lea.vmem %s0, %s369
        %s371 = smul.u32 2, %s22
        %s372 = smul.u32 2, %s22
        %p373 = scmp.lt.s32.totalorder %s372, 3
        %s374 = scalar_select %p373, %s372, 3
        %s375 = smul.addr %s374, 8
        %s376 = scalar_lea.vmem %s10, %s375
        %s377 = smul.u32 2, %s22
        %v378 = vld [vmem:[%s370] sm:$0xff]
        %v379 = vld [vmem:[%s370 + $0x8] sm:$0xff]
        %v380 = vld [vmem:[%s1] sm:$0xff]
        %v381 = vld [vmem:[%s1 + $0x8] sm:$0xff]
        %v382 = vld [vmem:[%s2] sm:$0x1]
        %v384 = vlaneseq
        %v385 = vshrl.u32 %v384, 7
        %v386 = vsub.s32 0, %v385
        %v387 = vrot.slane %v382, %v386
        %vm389 = vcmask 130048
        %v391 = vsel %vm389, %v378, 0
        %v394 = vsel %vm389, %v379, 0
        %396 = vmatprep.subr.mxu0 0.0
        %397 = vmatpush1.msra.mxu0 0.0
        %398 = vmatprep.subr.mxu0 0.0
        %399 = vmatpush1.msra.mxu0 0.0
        %400 = vmatprep.subr.mxu0 0.0
        %401 = vmatpush1.msra.mxu0 0.0
        %402 = vmatprep.subr.mxu0 0.0
        %403 = vmatpush1.msra.mxu0 0.0
        %404 = vmatprep.subr.mxu0 0.0
        %405 = vmatpush1.msra.mxu0 0.0
        %406 = vmatprep.subr.mxu0 0.0
        %407 = vmatpush1.msra.mxu0 0.0
        %408 = vmatprep.subr.mxu0 0.0
        %409 = vmatpush1.msra.mxu0 0.0
        %410 = vmatprep.subr.mxu0 0.0
        %411 = vmatpush1.msra.mxu0 0.0
        %412 = vmatprep.subr.mxu0 0.0
        %413 = vmatpush1.msra.mxu0 0.0
        %414 = vmatprep.subr.mxu0 0.0
        %415 = vmatpush1.msra.mxu0 0.0
        %416 = vmatprep.subr.mxu0 0.0
        %417 = vmatpush1.msra.mxu0 0.0
        %418 = vmatprep.subr.mxu0 0.0
        %419 = vmatpush1.msra.mxu0 0.0
        %420 = vmatprep.subr.mxu0 0.0
        %421 = vmatpush1.msra.mxu0 0.0
        %422 = vmatprep.subr.mxu0 0.0
        %423 = vmatpush1.msra.mxu0 0.0
        %424 = vmatprep.subr.mxu0 0.0
        %425 = vmatpush1.msra.mxu0 %v381
        %426 = vmatprep.subr.mxu0 0.0
        %427 = vmatpush1.msra.mxu0 %v380
        %428 = vmatprep.subr.mxu0 0.0
        %429 = vmatpush2.msra.mxu0 0.0
        %430 = vmatprep.subr.mxu0 0.0
        %431 = vmatpush2.msra.mxu0 0.0
        %432 = vmatprep.subr.mxu0 0.0
        %433 = vmatpush2.msra.mxu0 0.0
        %434 = vmatprep.subr.mxu0 0.0
        %435 = vmatpush2.msra.mxu0 0.0
        %436 = vmatprep.subr.mxu0 0.0
        %437 = vmatpush2.msra.mxu0 0.0
        %438 = vmatprep.subr.mxu0 0.0
        %439 = vmatpush2.msra.mxu0 0.0
        %440 = vmatprep.subr.mxu0 0.0
        %441 = vmatpush2.msra.mxu0 0.0
        %442 = vmatprep.subr.mxu0 0.0
        %443 = vmatpush2.msra.mxu0 0.0
        %444 = vmatprep.subr.mxu0 0.0
        %445 = vmatpush2.msra.mxu0 0.0
        %446 = vmatprep.subr.mxu0 0.0
        %447 = vmatpush2.msra.mxu0 0.0
        %448 = vmatprep.subr.mxu0 0.0
        %449 = vmatpush2.msra.mxu0 0.0
        %450 = vmatprep.subr.mxu0 0.0
        %451 = vmatpush2.msra.mxu0 0.0
        %452 = vmatprep.subr.mxu0 0.0
        %453 = vmatpush2.msra.mxu0 0.0
        %454 = vmatprep.subr.mxu0 0.0
        %455 = vmatpush2.msra.mxu0 0.0
        %456 = vmatprep.subr.mxu0 0.0
        %457 = vmatpush2.msra.mxu0 0.0
        %458 = vmatprep.subr.mxu0 0.0
        %459 = vmatpush2.msra.mxu0 0.0
        %460 = vmatprep.mubr.f32.mxu0 0.0
        %461 = vmatmul.mubr.f32.gmra.mxu0 %v391
        %v462 = vpop.f32.mrf.mxu0
        %v463 = vadd.f32 %v387, %v462
        %v464 = vpop.f32.mrf.mxu0
        %465 = vmatprep.mubr.f32.mxu0 0.0
        %466 = vmatmul.mubr.f32.gmra.mxu0 %v394
        %v467 = vpop.f32.mrf.mxu0
        %v468 = vadd.f32 %v387, %v467
        %v469 = vpop.f32.mrf.mxu0
        %470 = vdwg.mxu0
        %v471 = vmax.f32 %v463, 0.0
        %v472 = vmax.f32 %v468, 0.0
        %v473 = vld [vmem:[%s3] sm:$0xff]
        %v474 = vld [vmem:[%s3 + $0x8] sm:$0xff]
        %v475 = vld [vmem:[%s3 + $0x10] sm:$0xff]
        %v476 = vld [vmem:[%s3 + $0x18] sm:$0xff]
        %v477 = vld [vmem:[%s3 + $0x20] sm:$0xff]
        %v478 = vld [vmem:[%s3 + $0x28] sm:$0xff]
        %v479 = vld [vmem:[%s3 + $0x30] sm:$0xff]
        %v480 = vld [vmem:[%s3 + $0x38] sm:$0xff]
        %v481 = vld [vmem:[%s3 + $0x40] sm:$0xff]
        %v482 = vld [vmem:[%s3 + $0x48] sm:$0xff]
        %v483 = vld [vmem:[%s3 + $0x50] sm:$0xff]
        %v484 = vld [vmem:[%s3 + $0x58] sm:$0xff]
        %v485 = vld [vmem:[%s4] sm:$0x1]
        %v487 = vlaneseq
        %v488 = vshrl.u32 %v487, 7
        %v489 = vsub.s32 0, %v488
        %v490 = vrot.slane %v485, %v489
        %vm492 = vcmask 785408
        %v494 = vsel %vm492, %v471, 0
        %v497 = vsel %vm492, %v472, 0
        %499 = vmatprep.subr.mxu0 0.0
        %500 = vmatpush1.msra.mxu0 0.0
        %501 = vmatprep.subr.mxu0 0.0
        %502 = vmatpush1.msra.mxu0 0.0
        %503 = vmatprep.subr.mxu0 0.0
        %504 = vmatpush1.msra.mxu0 0.0
        %505 = vmatprep.subr.mxu0 0.0
        %506 = vmatpush1.msra.mxu0 0.0
        %507 = vmatprep.subr.mxu0 0.0
        %508 = vmatpush1.msra.mxu0 %v484
        %509 = vmatprep.subr.mxu0 0.0
        %510 = vmatpush1.msra.mxu0 %v483
        %511 = vmatprep.subr.mxu0 0.0
        %512 = vmatpush1.msra.mxu0 %v482
        %513 = vmatprep.subr.mxu0 0.0
        %514 = vmatpush1.msra.mxu0 %v481
        %515 = vmatprep.subr.mxu0 0.0
        %516 = vmatpush1.msra.mxu0 %v480
        %517 = vmatprep.subr.mxu0 0.0
        %518 = vmatpush1.msra.mxu0 %v479
        %519 = vmatprep.subr.mxu0 0.0
        %520 = vmatpush1.msra.mxu0 %v478
        %521 = vmatprep.subr.mxu0 0.0
        %522 = vmatpush1.msra.mxu0 %v477
        %523 = vmatprep.subr.mxu0 0.0
        %524 = vmatpush1.msra.mxu0 %v476
        %525 = vmatprep.subr.mxu0 0.0
        %526 = vmatpush1.msra.mxu0 %v475
        %527 = vmatprep.subr.mxu0 0.0
        %528 = vmatpush1.msra.mxu0 %v474
        %529 = vmatprep.subr.mxu0 0.0
        %530 = vmatpush1.msra.mxu0 %v473
        %531 = vmatprep.subr.mxu0 0.0
        %532 = vmatpush2.msra.mxu0 0.0
        %533 = vmatprep.subr.mxu0 0.0
        %534 = vmatpush2.msra.mxu0 0.0
        %535 = vmatprep.subr.mxu0 0.0
        %536 = vmatpush2.msra.mxu0 0.0
        %537 = vmatprep.subr.mxu0 0.0
        %538 = vmatpush2.msra.mxu0 0.0
        %539 = vmatprep.subr.mxu0 0.0
        %540 = vmatpush2.msra.mxu0 0.0
        %541 = vmatprep.subr.mxu0 0.0
        %542 = vmatpush2.msra.mxu0 0.0
        %543 = vmatprep.subr.mxu0 0.0
        %544 = vmatpush2.msra.mxu0 0.0
        %545 = vmatprep.subr.mxu0 0.0
        %546 = vmatpush2.msra.mxu0 0.0
        %547 = vmatprep.subr.mxu0 0.0
        %548 = vmatpush2.msra.mxu0 0.0
        %549 = vmatprep.subr.mxu0 0.0
        %550 = vmatpush2.msra.mxu0 0.0
        %551 = vmatprep.subr.mxu0 0.0
        %552 = vmatpush2.msra.mxu0 0.0
        %553 = vmatprep.subr.mxu0 0.0
        %554 = vmatpush2.msra.mxu0 0.0
        %555 = vmatprep.subr.mxu0 0.0
        %556 = vmatpush2.msra.mxu0 0.0
        %557 = vmatprep.subr.mxu0 0.0
        %558 = vmatpush2.msra.mxu0 0.0
        %559 = vmatprep.subr.mxu0 0.0
        %560 = vmatpush2.msra.mxu0 0.0
        %561 = vmatprep.subr.mxu0 0.0
        %562 = vmatpush2.msra.mxu0 0.0
        %563 = vmatprep.mubr.f32.mxu0 0.0
        %564 = vmatmul.mubr.f32.gmra.mxu0 %v494
        %v565 = vpop.f32.mrf.mxu0
        %v566 = vadd.f32 %v490, %v565
        %v567 = vpop.f32.mrf.mxu0
        %568 = vmatprep.mubr.f32.mxu0 0.0
        %569 = vmatmul.mubr.f32.gmra.mxu0 %v497
        %v570 = vpop.f32.mrf.mxu0
        %v571 = vadd.f32 %v490, %v570
        %v572 = vpop.f32.mrf.mxu0
        %573 = vdwg.mxu0
        %v574 = vmax.f32 %v566, 0.0
        %v575 = vmax.f32 %v571, 0.0
        %v576 = vld [vmem:[#allocation2] sm:$0xff]
        %v577 = vld [vmem:[#allocation2 + $0x8] sm:$0xff]
        %v578 = vld [vmem:[#allocation2 + $0x10] sm:$0xff]
        %v579 = vld [vmem:[#allocation2 + $0x18] sm:$0xff]
        %v580 = vld [vmem:[#allocation2 + $0x20] sm:$0xff]
        %v581 = vld [vmem:[#allocation2 + $0x28] sm:$0xff]
        %v582 = vld [vmem:[#allocation2 + $0x30] sm:$0xff]
        %v583 = vld [vmem:[#allocation2 + $0x38] sm:$0xff]
        %v584 = vld [vmem:[#allocation2 + $0x40] sm:$0xff]
        %v585 = vld [vmem:[#allocation2 + $0x48] sm:$0xff]
        %v586 = vld [vmem:[#allocation2 + $0x50] sm:$0xff]
        %v587 = vld [vmem:[#allocation2 + $0x58] sm:$0xff]
        %v588 = vld [vmem:[%s6] sm:$0xff]
        %v589 = vld [vmem:[%s6 + $0x8] sm:$0xff]
        %590 = vmatprep.subr.mxu0 0.0
        %591 = vmatpush1.msra.mxu0 0.0
        %592 = vmatprep.subr.mxu0 0.0
        %593 = vmatpush1.msra.mxu0 0.0
        %594 = vmatprep.subr.mxu0 0.0
        %595 = vmatpush1.msra.mxu0 0.0
        %596 = vmatprep.subr.mxu0 0.0
        %597 = vmatpush1.msra.mxu0 0.0
        %598 = vmatprep.subr.mxu0 0.0
        %599 = vmatpush1.msra.mxu0 0.0
        %600 = vmatprep.subr.mxu0 0.0
        %601 = vmatpush1.msra.mxu0 0.0
        %602 = vmatprep.subr.mxu0 0.0
        %603 = vmatpush1.msra.mxu0 0.0
        %604 = vmatprep.subr.mxu0 0.0
        %605 = vmatpush1.msra.mxu0 0.0
        %606 = vmatprep.subr.mxu0 0.0
        %607 = vmatpush1.msra.mxu0 0.0
        %608 = vmatprep.subr.mxu0 0.0
        %609 = vmatpush1.msra.mxu0 0.0
        %610 = vmatprep.subr.mxu0 0.0
        %611 = vmatpush1.msra.mxu0 0.0
        %612 = vmatprep.subr.mxu0 0.0
        %613 = vmatpush1.msra.mxu0 0.0
        %614 = vmatprep.subr.mxu0 0.0
        %615 = vmatpush1.msra.mxu0 0.0
        %616 = vmatprep.subr.mxu0 0.0
        %617 = vmatpush1.msra.mxu0 0.0
        %618 = vmatprep.subr.mxu0 0.0
        %619 = vmatpush1.msra.mxu0 %v589
        %620 = vmatprep.subr.mxu0 0.0
        %621 = vmatpush1.msra.mxu0 %v588
        %622 = vmatprep.subr.mxu0 0.0
        %623 = vmatpush2.msra.mxu0 0.0
        %624 = vmatprep.subr.mxu0 0.0
        %625 = vmatpush2.msra.mxu0 0.0
        %626 = vmatprep.subr.mxu0 0.0
        %627 = vmatpush2.msra.mxu0 0.0
        %628 = vmatprep.subr.mxu0 0.0
        %629 = vmatpush2.msra.mxu0 0.0
        %630 = vmatprep.subr.mxu0 0.0
        %631 = vmatpush2.msra.mxu0 0.0
        %632 = vmatprep.subr.mxu0 0.0
        %633 = vmatpush2.msra.mxu0 0.0
        %634 = vmatprep.subr.mxu0 0.0
        %635 = vmatpush2.msra.mxu0 0.0
        %636 = vmatprep.subr.mxu0 0.0
        %637 = vmatpush2.msra.mxu0 0.0
        %638 = vmatprep.subr.mxu0 0.0
        %639 = vmatpush2.msra.mxu0 0.0
        %640 = vmatprep.subr.mxu0 0.0
        %641 = vmatpush2.msra.mxu0 0.0
        %642 = vmatprep.subr.mxu0 0.0
        %643 = vmatpush2.msra.mxu0 0.0
        %644 = vmatprep.subr.mxu0 0.0
        %645 = vmatpush2.msra.mxu0 0.0
        %646 = vmatprep.subr.mxu0 0.0
        %647 = vmatpush2.msra.mxu0 0.0
        %648 = vmatprep.subr.mxu0 0.0
        %649 = vmatpush2.msra.mxu0 0.0
        %650 = vmatprep.subr.mxu0 0.0
        %651 = vmatpush2.msra.mxu0 0.0
        %652 = vmatprep.subr.mxu0 0.0
        %653 = vmatpush2.msra.mxu0 0.0
        %654 = vmatprep.mubr.f32.mxu0 0.0
        %655 = vmatmul.mubr.f32.gmra.mxu0 %v391
        %v656 = vpop.f32.mrf.mxu0
        %v657 = vadd.f32 0.0, %v656
        %v658 = vpop.f32.mrf.mxu0
        %659 = vmatprep.mubr.f32.mxu0 0.0
        %660 = vmatmul.mubr.f32.gmra.mxu0 %v394
        %v661 = vpop.f32.mrf.mxu0
        %v662 = vadd.f32 0.0, %v661
        %v663 = vpop.f32.mrf.mxu0
        %664 = vdwg.mxu0
        %v666 = vsel %vm492, %v574, 0
        %v669 = vsel %vm492, %v575, 0
        %671 = vmatprep.subr.mxu0 0.0
        %672 = vmatpush1.msra.mxu0 0.0
        %673 = vmatprep.subr.mxu0 0.0
        %674 = vmatpush1.msra.mxu0 0.0
        %675 = vmatprep.subr.mxu0 0.0
        %676 = vmatpush1.msra.mxu0 0.0
        %677 = vmatprep.subr.mxu0 0.0
        %678 = vmatpush1.msra.mxu0 0.0
        %679 = vmatprep.subr.mxu0 0.0
        %680 = vmatpush1.msra.mxu0 %v587
        %681 = vmatprep.subr.mxu0 0.0
        %682 = vmatpush1.msra.mxu0 %v586
        %683 = vmatprep.subr.mxu0 0.0
        %684 = vmatpush1.msra.mxu0 %v585
        %685 = vmatprep.subr.mxu0 0.0
        %686 = vmatpush1.msra.mxu0 %v584
        %687 = vmatprep.subr.mxu0 0.0
        %688 = vmatpush1.msra.mxu0 %v583
        %689 = vmatprep.subr.mxu0 0.0
        %690 = vmatpush1.msra.mxu0 %v582
        %691 = vmatprep.subr.mxu0 0.0
        %692 = vmatpush1.msra.mxu0 %v581
        %693 = vmatprep.subr.mxu0 0.0
        %694 = vmatpush1.msra.mxu0 %v580
        %695 = vmatprep.subr.mxu0 0.0
        %696 = vmatpush1.msra.mxu0 %v579
        %697 = vmatprep.subr.mxu0 0.0
        %698 = vmatpush1.msra.mxu0 %v578
        %699 = vmatprep.subr.mxu0 0.0
        %700 = vmatpush1.msra.mxu0 %v577
        %701 = vmatprep.subr.mxu0 0.0
        %702 = vmatpush1.msra.mxu0 %v576
        %703 = vmatprep.subr.mxu0 0.0
        %704 = vmatpush2.msra.mxu0 0.0
        %705 = vmatprep.subr.mxu0 0.0
        %706 = vmatpush2.msra.mxu0 0.0
        %707 = vmatprep.subr.mxu0 0.0
        %708 = vmatpush2.msra.mxu0 0.0
        %709 = vmatprep.subr.mxu0 0.0
        %710 = vmatpush2.msra.mxu0 0.0
        %711 = vmatprep.subr.mxu0 0.0
        %712 = vmatpush2.msra.mxu0 0.0
        %713 = vmatprep.subr.mxu0 0.0
        %714 = vmatpush2.msra.mxu0 0.0
        %715 = vmatprep.subr.mxu0 0.0
        %716 = vmatpush2.msra.mxu0 0.0
        %717 = vmatprep.subr.mxu0 0.0
        %718 = vmatpush2.msra.mxu0 0.0
        %719 = vmatprep.subr.mxu0 0.0
        %720 = vmatpush2.msra.mxu0 0.0
        %721 = vmatprep.subr.mxu0 0.0
        %722 = vmatpush2.msra.mxu0 0.0
        %723 = vmatprep.subr.mxu0 0.0
        %724 = vmatpush2.msra.mxu0 0.0
        %725 = vmatprep.subr.mxu0 0.0
        %726 = vmatpush2.msra.mxu0 0.0
        %727 = vmatprep.subr.mxu0 0.0
        %728 = vmatpush2.msra.mxu0 0.0
        %729 = vmatprep.subr.mxu0 0.0
        %730 = vmatpush2.msra.mxu0 0.0
        %731 = vmatprep.subr.mxu0 0.0
        %732 = vmatpush2.msra.mxu0 0.0
        %733 = vmatprep.subr.mxu0 0.0
        %734 = vmatpush2.msra.mxu0 0.0
        %735 = vmatprep.mubr.f32.mxu0 0.0
        %736 = vmatmul.mubr.f32.gmra.mxu0 %v666
        %v737 = vpop.f32.mrf.mxu0
        %v738 = vadd.f32 %v657, %v737
        %v739 = vpop.f32.mrf.mxu0
        %740 = vmatprep.mubr.f32.mxu0 0.0
        %741 = vmatmul.mubr.f32.gmra.mxu0 %v669
        %v742 = vpop.f32.mrf.mxu0
        %v743 = vadd.f32 %v662, %v742
        %v744 = vpop.f32.mrf.mxu0
        %745 = vdwg.mxu0
        %v746 = vld [vmem:[%s7] sm:$0x1]
        %v748 = vlaneseq
        %v749 = vshrl.u32 %v748, 7
        %v750 = vsub.s32 0, %v749
        %v751 = vrot.slane %v746, %v750
        %v753 = vadd.f32 %v738, %v751
        %v754 = vadd.f32 %v743, %v751
        %v755 = vmax.f32 %v753, 0.0
        %v756 = vmax.f32 %v754, 0.0
        %v757 = vld [vmem:[%s8] sm:$0xff]
        %v758 = vld [vmem:[%s8 + $0x8] sm:$0xff]
        %v759 = vld [vmem:[%s8 + $0x10] sm:$0xff]
        %v760 = vld [vmem:[%s8 + $0x18] sm:$0xff]
        %v761 = vld [vmem:[%s8 + $0x20] sm:$0xff]
        %v762 = vld [vmem:[%s8 + $0x28] sm:$0xff]
        %v763 = vld [vmem:[%s8 + $0x30] sm:$0xff]
        %v764 = vld [vmem:[%s8 + $0x38] sm:$0xff]
        %v765 = vld [vmem:[%s8 + $0x40] sm:$0xff]
        %v766 = vld [vmem:[%s8 + $0x48] sm:$0xff]
        %v767 = vld [vmem:[%s8 + $0x50] sm:$0xff]
        %v768 = vld [vmem:[%s8 + $0x58] sm:$0xff]
        %v769 = vld [vmem:[%s9] sm:$0x1]
        %v771 = vlaneseq
        %v772 = vshrl.u32 %v771, 7
        %v773 = vsub.s32 0, %v772
        %v774 = vrot.slane %v769, %v773
        %v777 = vsel %vm492, %v755, 0
        %v780 = vsel %vm492, %v756, 0
        %782 = vmatprep.subr.mxu0 0.0
        %783 = vmatpush1.msra.mxu0 0.0
        %784 = vmatprep.subr.mxu0 0.0
        %785 = vmatpush1.msra.mxu0 0.0
        %786 = vmatprep.subr.mxu0 0.0
        %787 = vmatpush1.msra.mxu0 0.0
        %788 = vmatprep.subr.mxu0 0.0
        %789 = vmatpush1.msra.mxu0 0.0
        %790 = vmatprep.subr.mxu0 0.0
        %791 = vmatpush1.msra.mxu0 %v768
        %792 = vmatprep.subr.mxu0 0.0
        %793 = vmatpush1.msra.mxu0 %v767
        %794 = vmatprep.subr.mxu0 0.0
        %795 = vmatpush1.msra.mxu0 %v766
        %796 = vmatprep.subr.mxu0 0.0
        %797 = vmatpush1.msra.mxu0 %v765
        %798 = vmatprep.subr.mxu0 0.0
        %799 = vmatpush1.msra.mxu0 %v764
        %800 = vmatprep.subr.mxu0 0.0
        %801 = vmatpush1.msra.mxu0 %v763
        %802 = vmatprep.subr.mxu0 0.0
        %803 = vmatpush1.msra.mxu0 %v762
        %804 = vmatprep.subr.mxu0 0.0
        %805 = vmatpush1.msra.mxu0 %v761
        %806 = vmatprep.subr.mxu0 0.0
        %807 = vmatpush1.msra.mxu0 %v760
        %808 = vmatprep.subr.mxu0 0.0
        %809 = vmatpush1.msra.mxu0 %v759
        %810 = vmatprep.subr.mxu0 0.0
        %811 = vmatpush1.msra.mxu0 %v758
        %812 = vmatprep.subr.mxu0 0.0
        %813 = vmatpush1.msra.mxu0 %v757
        %814 = vmatprep.subr.mxu0 0.0
        %815 = vmatpush2.msra.mxu0 0.0
        %816 = vmatprep.subr.mxu0 0.0
        %817 = vmatpush2.msra.mxu0 0.0
        %818 = vmatprep.subr.mxu0 0.0
        %819 = vmatpush2.msra.mxu0 0.0
        %820 = vmatprep.subr.mxu0 0.0
        %821 = vmatpush2.msra.mxu0 0.0
        %822 = vmatprep.subr.mxu0 0.0
        %823 = vmatpush2.msra.mxu0 0.0
        %824 = vmatprep.subr.mxu0 0.0
        %825 = vmatpush2.msra.mxu0 0.0
        %826 = vmatprep.subr.mxu0 0.0
        %827 = vmatpush2.msra.mxu0 0.0
        %828 = vmatprep.subr.mxu0 0.0
        %829 = vmatpush2.msra.mxu0 0.0
        %830 = vmatprep.subr.mxu0 0.0
        %831 = vmatpush2.msra.mxu0 0.0
        %832 = vmatprep.subr.mxu0 0.0
        %833 = vmatpush2.msra.mxu0 0.0
        %834 = vmatprep.subr.mxu0 0.0
        %835 = vmatpush2.msra.mxu0 0.0
        %836 = vmatprep.subr.mxu0 0.0
        %837 = vmatpush2.msra.mxu0 0.0
        %838 = vmatprep.subr.mxu0 0.0
        %839 = vmatpush2.msra.mxu0 0.0
        %840 = vmatprep.subr.mxu0 0.0
        %841 = vmatpush2.msra.mxu0 0.0
        %842 = vmatprep.subr.mxu0 0.0
        %843 = vmatpush2.msra.mxu0 0.0
        %844 = vmatprep.subr.mxu0 0.0
        %845 = vmatpush2.msra.mxu0 0.0
        %846 = vmatprep.mubr.f32.mxu0 0.0
        %847 = vmatmul.mubr.f32.gmra.mxu0 %v777
        %v848 = vpop.f32.mrf.mxu0
        %v849 = vadd.f32 %v774, %v848
        %v850 = vpop.f32.mrf.mxu0
        %851 = vmatprep.mubr.f32.mxu0 0.0
        %852 = vmatmul.mubr.f32.gmra.mxu0 %v780
        %v853 = vpop.f32.mrf.mxu0
        %v854 = vadd.f32 %v774, %v853
        %v855 = vpop.f32.mrf.mxu0
        %856 = vdwg.mxu0
        %v857 = vtanh.pop %v849
        %v858 = vtanh.pop %v854
        %vm859 = vcmask 72704
        %860 = vst.msk [vmem:[%s376] sm:$0xff] %vm859, %v857
        %861 = vst.msk [vmem:[%s376 + $0x8] sm:$0xff] %vm859, %v858
        %s862 = smul.u32 2, %s22
        %p863 = scmp.lt.s32.totalorder %s862, 3
        %s864 = scalar_select %p863, %s862, 3
        %s865 = smul.addr %s864, 8
        %s866 = scalar_lea.vmem %s10, %s865
        // Predicated region
        $region65: #{tpu_custom_call.1} parent=59 // pred_check
          %p867 = pneg %p255
        $region66: #{tpu_custom_call.1} parent=59 // pred_check_branch
          %869 = sbr.rel (%p867) target = $region68
        $region67: #{tpu_custom_call.1} parent=59 // pred_region
          %s870 = smul.u32 2, %s22
        $region68: #{tpu_custom_call.1} parent=59 // pred_fallthru
          _
      $region60: #{tpu_custom_call.1} parent=5 // pred_fallthru
        _
      %p871 = scmp.le.s32.totalorder 2, %s17
      // Predicated region
      $region69: #{tpu_custom_call.1} parent=5 // pred_check
        %p872 = pneg %p871
      $region70: #{tpu_custom_call.1} parent=5 // pred_check_branch
        %874 = sbr.rel (%p872) target = $region72
      $region71: #{tpu_custom_call.1} parent=5 // pred_region
        %s875 = ssub.s32 %s17, 2
        // Predicated region
        $region73: #{tpu_custom_call.1} parent=71 // pred_check
          %p876 = pneg %p261
        $region74: #{tpu_custom_call.1} parent=71 // pred_check_branch
          %878 = sbr.rel (%p876) target = $region76
        $region75: #{tpu_custom_call.1} parent=71 // pred_region
          %s879 = smul.u32 2, %s23
          %p880 = scmp.lt.s32.totalorder %s879, 3
          %s881 = scalar_select %p880, %s879, 3
          %s882 = smul.addr %s881, 8
          %s883 = scalar_lea.vmem %s10, %s882
        $region76: #{tpu_custom_call.1} parent=71 // pred_fallthru
          _
      $region72: #{tpu_custom_call.1} parent=5 // pred_fallthru
        _
    $region6: #{tpu_custom_call.1} parent=1 // loop_footer
      %s21 = sadd.s32 1, %s17
    $region7: #{tpu_custom_call.1} parent=1 // loop_footer_branch
      %16 = sbr.rel target = $region3
    $region8: #{tpu_custom_call.1} parent=1 // loop_exit
      _
    %884 = vsyncpa [#allocation3], 1
    %s885 = scalar_lea.sflag [#allocation3], 1
    %886 = vsyncpa %s885, 1

</llo_original>
